<compile_context>
chip_gen: v6e
topology: v6e:2x2x1
jax: 0.10.0
libtpu: 0.0.40
codegen_flags: <defaults>
</compile_context>

<pallas_src>
import functools
import math

import jax
import jax.numpy as jnp
from jax.experimental import pallas as pl
from jax.experimental.pallas import tpu as pltpu


def _round_up(x, m):
    return ((x + m - 1) // m) * m


# Conservative double-buffered VMEM budget: fits v5e's 16 MiB scoped default
# and is well under v7x's 32 MiB scoped / 64 MiB physical VMEM.
_VMEM_BUDGET = 14 * 1024 * 1024


def _choose_tiles(B, Kp, Np, *, x_bytes=4, w_bytes=2, y_bytes=4):
    """Pick (tm, tn, tk, Bp).  Kp/Np are the already-128-padded K/N extents."""
    Bp = _round_up(max(B, 16), 16)          # 16-row multiples: bf16 sublane packing

    def ws(tm, tn, tk):                     # double-buffered working set (bytes)
        return (2 * tm * tk * x_bytes       # x tiles (f32 in HBM)
                + 2 * tk * tn * w_bytes     # W^T tiles
                + 2 * tm * tn * y_bytes     # y tiles
                + tm * tn * 4               # f32 accumulator scratch
                + 2 * tn * 4                # bias tiles
                + 2 * 8 * 128 * 4)          # finiteness flag tiles

    def pick(total, cands):
        for c in cands:
            if c <= total and total % c == 0:
                return c
        return cands[-1]

    # Preferred layout: W^T fully VMEM-resident (tn=Np, tk=Kp).  Its block
    # index is constant across the grid, so W is read from HBM exactly once —
    # the dominant cost in the memory-bound regime of this layer.
    for tm in (1024, 512, 256, 128, 64, 32, 16):
        if tm <= Bp and Bp % tm == 0 and ws(tm, Np, Kp) <= _VMEM_BUDGET:
            return tm, Np, Kp, Bp

    # Fallback for very large layers: big lane-dense (M, N, K) tiles
    # (~9–11 MiB double-buffered at 512/512/1024) — still inside the budget.
    tm = pick(Bp, (512, 256, 128, 64, 32, 16))
    tn = pick(Np, (512, 256, 128))
    tk = pick(Kp, (1024, 512, 256, 128))
    return tm, tn, tk, Bp


def _finite_flag(y, flag_ref):
    # Scalar reduce, then splat — no where/select temporaries.  Checked AFTER
    # the cast to the output dtype so an out-dtype overflow is also caught.
    ok = jnp.all(jnp.isfinite(y)).astype(jnp.int32)
    flag_ref[...] = jnp.broadcast_to(ok.reshape(1, 1), flag_ref.shape)


def _linear_single_k_kernel(x_ref, w_ref, b_ref, y_ref, flag_ref):
    # Single K tile (W resident): fuse matmul + bias + cast + flag, no scratch.
    y = jnp.dot(x_ref[...].astype(w_ref.dtype), w_ref[...],
                preferred_element_type=jnp.float32) + b_ref[...]
    y = y.astype(y_ref.dtype)
    y_ref[...] = y
    _finite_flag(y, flag_ref)


def _linear_accum_kernel(x_ref, w_ref, b_ref, y_ref, flag_ref, acc_ref):
    k = pl.program_id(2)

    @pl.when(k == 0)
    def _init():
        acc_ref[...] = jnp.zeros_like(acc_ref)

    # Pure MXU accumulate; the f32->bf16 cast of the x tile rides VPU slack.
    acc_ref[...] += jnp.dot(x_ref[...].astype(w_ref.dtype), w_ref[...],
                            preferred_element_type=jnp.float32)

    @pl.when(k == pl.num_programs(2) - 1)
    def _finalize():
        y = (acc_ref[...] + b_ref[...]).astype(y_ref.dtype)
        y_ref[...] = y
        _finite_flag(y, flag_ref)


@functools.partial(jax.jit, static_argnums=(3, 4, 5))
def _linear_regressor_forward(x, w_t, b_p, dim_input, dim_output, out_dtype):
    """Jitted device path: pad x, run the Pallas matmul+bias kernel, slice the
    result, and reduce the per-tile finiteness flags to one scalar."""
    B = x.shape[0]
    Kp, Np = w_t.shape
    tm, tn, tk, Bp = _choose_tiles(
        B, Kp, Np,
        x_bytes=x.dtype.itemsize,
        w_bytes=w_t.dtype.itemsize,
        y_bytes=jnp.dtype(out_dtype).itemsize,
    )

    pad_m, pad_k = Bp - B, Kp - dim_input
    x_p = jnp.pad(x, ((0, pad_m), (0, pad_k))) if (pad_m or pad_k) else x

    gm, gn, gk = Bp // tm, Np // tn, Kp // tk
    out_shape = (
        jax.ShapeDtypeStruct((Bp, Np), out_dtype),
        jax.ShapeDtypeStruct((gm * 8, gn * 128), jnp.int32),
    )

    if gk == 1:
        kernel = _linear_single_k_kernel
        grid = (gm, gn)
        in_specs = [
            pl.BlockSpec((tm, tk), lambda i, j: (i, 0)),   # x tile
            pl.BlockSpec((tk, tn), lambda i, j: (0, j)),   # W^T tile (resident)
            pl.BlockSpec((1, tn), lambda i, j: (0, j)),    # bias tile
        ]
        out_specs = [
            pl.BlockSpec((tm, tn), lambda i, j: (i, j)),   # y tile
            pl.BlockSpec((8, 128), lambda i, j: (i, j)),   # finite flag
        ]
        scratch = ()
        dims = ("parallel", "parallel")
    else:
        kernel = _linear_accum_kernel
        grid = (gm, gn, gk)
        in_specs = [
            pl.BlockSpec((tm, tk), lambda i, j, k: (i, k)),
            pl.BlockSpec((tk, tn), lambda i, j, k: (k, j)),
            pl.BlockSpec((1, tn), lambda i, j, k: (0, j)),
        ]
        out_specs = [
            pl.BlockSpec((tm, tn), lambda i, j, k: (i, j)),
            pl.BlockSpec((8, 128), lambda i, j, k: (i, j)),
        ]
        scratch = (pltpu.VMEM((tm, tn), jnp.float32),)
        dims = ("parallel", "parallel", "arbitrary")

    y_pad, flags = pl.pallas_call(
        kernel,
        out_shape=out_shape,
        grid_spec=pltpu.PrefetchScalarGridSpec(
            num_scalar_prefetch=0,
            grid=grid,
            in_specs=in_specs,
            out_specs=out_specs,
            scratch_shapes=scratch,
        ),
        compiler_params=pltpu.CompilerParams(dimension_semantics=dims),
    )(x_p, w_t, b_p)

    y = y_pad[:B, :dim_output]
    ok = jnp.all(flags != 0)
    return y, ok


class LinearRegressor:
    """Pallas-TPU port of the `LinearRegressor` final layer.

    compute_dtype is the MXU operand dtype.  bfloat16 (default, documented
    divergence from PyTorch's f32 matmul) uses the fast MXU path with f32
    accumulation; pass jnp.float32 for bit-closer-to-PyTorch numerics.
    """

    def __init__(self, dim_input, dim_output, *, key, dtype=jnp.float32,
                 compute_dtype=jnp.bfloat16):
        self.dim_input = int(dim_input)
        self.dim_output = int(dim_output)
        self.out_dtype = dtype
        self.compute_dtype = compute_dtype
        # PyTorch nn.Linear default init: U(-1/sqrt(fan_in), 1/sqrt(fan_in)).
        k_w, k_b = jax.random.split(key)
        bound = 1.0 / math.sqrt(dim_input)
        weight = jax.random.uniform(k_w, (dim_output, dim_input),
                                    dtype=jnp.float32, minval=-bound, maxval=bound)
        bias = jax.random.uniform(k_b, (dim_output,), dtype=jnp.float32,
                                  minval=-bound, maxval=bound)
        self.set_params(weight, bias)

    def set_params(self, weight, bias):
        """One-time parameter prep (hoisted out of the per-call path):
        transpose to (Din, Dout), pad lane-dense, cast the MXU operand."""
        self.weight = weight                      # (Dout, Din), PyTorch layout
        self.bias = bias                          # (Dout,)
        Kp = _round_up(self.dim_input, 128)
        Np = _round_up(self.dim_output, 128)
        w_t = jnp.pad(weight.T, ((0, Kp - self.dim_input),
                                 (0, Np - self.dim_output)))
        self.w_t = w_t.astype(self.compute_dtype)                 # (Kp, Np)
        self.b_p = jnp.pad(bias.astype(jnp.float32),
                           (0, Np - self.dim_output)).reshape(1, Np)  # (1, Np)

    def __call__(self, x):
        y, ok = _linear_regressor_forward(
            x, self.w_t, self.b_p, self.dim_input, self.dim_output,
            self.out_dtype)
        # Mirrors `if not torch.isfinite(y).all(): raise ValueError`; only one
        # reduced scalar crosses device->host here.
        # TODO(synk): this host check only works in eager mode; under jax.jit
        # tracing the raise cannot fire (behavioral divergence noted).
        if not bool(ok):
            raise ValueError("non-finite values in LinearRegressor output")
        return y


if __name__ == "__main__":
    key = jax.random.PRNGKey(0)
    k_x, k_p = jax.random.split(key)

    batch, dim_input, dim_output = 8, 32, 16
    model = LinearRegressor(dim_input, dim_output, key=k_p)
    x = jax.random.normal(k_x, (batch, dim_input), dtype=jnp.float32)

    y = model(x)
    jax.block_until_ready(y)

    # Reference with the same bf16-operand / f32-accumulate numerics.
    y_ref = jnp.dot(
        x.astype(jnp.bfloat16),
        model.weight.T.astype(jnp.bfloat16),
        preferred_element_type=jnp.float32,
    ) + model.bias

    assert y.shape == (batch, dim_output)
    assert y.dtype == jnp.float32
    assert jnp.allclose(y, y_ref, atol=1e-2, rtol=1e-2)

    print("KERNEL_OK")
</pallas_src>

<mosaic_0001>
module attributes {stable_mosaic.version = 11 : i64} {
  func.func @_linear_single_k_kernel(%arg0: i32, %arg1: i32, %arg2: memref<16x128xf32, #tpu.memory_space<vmem>>, %arg3: memref<128x128xbf16, #tpu.memory_space<vmem>>, %arg4: memref<1x128xf32, #tpu.memory_space<vmem>>, %arg5: memref<16x128xf32, #tpu.memory_space<vmem>>, %arg6: memref<8x128xi32, #tpu.memory_space<vmem>>) attributes {dimension_semantics = [#tpu.dimension_semantics<parallel>, #tpu.dimension_semantics<parallel>], iteration_bounds = array<i64: 1, 1>, scalar_prefetch = 0 : i64, scratch_operands = 0 : i64, tpu.core_type = #tpu.core_type<tc>, window_params = [{transform_indices = @transform_0, window_bounds = array<i64: 16, 128>}, {transform_indices = @transform_1, window_bounds = array<i64: 128, 128>}, {transform_indices = @transform_2, window_bounds = array<i64: 1, 128>}, {transform_indices = @transform_3, window_bounds = array<i64: 16, 128>}, {transform_indices = @transform_4, window_bounds = array<i64: 8, 128>}]} {
    %c0 = arith.constant 0 : index
    %c0_0 = arith.constant 0 : index
    %0 = vector.load %arg2[%c0, %c0_0] : memref<16x128xf32, #tpu.memory_space<vmem>>, vector<16x128xf32>
    %1 = arith.truncf %0 : vector<16x128xf32> to vector<16x128xbf16>
    %c0_1 = arith.constant 0 : index
    %c0_2 = arith.constant 0 : index
    %2 = vector.load %arg3[%c0_1, %c0_2] : memref<128x128xbf16, #tpu.memory_space<vmem>>, vector<128x128xbf16>
    %cst = arith.constant dense<0.000000e+00> : vector<16x128xf32>
    %3 = tpu.matmul %1, %2, %cst {dimension_numbers = #tpu.dot_dimension_numbers<[1], [0], [0], [1], [0, 0, 1, 1], [], []>} : vector<16x128xbf16>, vector<128x128xbf16>, vector<16x128xf32> -> vector<16x128xf32>
    %c0_3 = arith.constant 0 : index
    %c0_4 = arith.constant 0 : index
    %4 = vector.load %arg4[%c0_3, %c0_4] : memref<1x128xf32, #tpu.memory_space<vmem>>, vector<1x128xf32>
    %5 = vector.broadcast %4 : vector<1x128xf32> to vector<16x128xf32>
    %6 = arith.addf %3, %5 : vector<16x128xf32>
    %c0_5 = arith.constant 0 : index
    %c0_6 = arith.constant 0 : index
    %7 = vector.load %arg5[%c0_5, %c0_6] : memref<16x128xf32, #tpu.memory_space<vmem>>, vector<16x128xf32>
    tpu.vector_store %arg5[%c0_5, %c0_6], %6 {strides = array<i32>} : memref<16x128xf32, #tpu.memory_space<vmem>>, vector<16x128xf32>,
    %8 = tpu.weird %6 : vector<16x128xf32> -> vector<16x128xi1>
    %cst_7 = arith.constant dense<true> : vector<16x128xi1>
    %9 = arith.xori %8, %cst_7 : vector<16x128xi1>
    %cst_8 = arith.constant 1.000000e+00 : f32
    %cst_9 = arith.constant 0.000000e+00 : f32
    %10 = vector.broadcast %cst_8 : f32 to vector<16x128xf32>
    %11 = vector.broadcast %cst_9 : f32 to vector<16x128xf32>
    %12 = arith.select %9, %10, %11 : vector<16x128xi1>, vector<16x128xf32>
    %13 = vector.shape_cast %12 : vector<16x128xf32> to vector<1x16x128xf32>
    %cst_10 = arith.constant dense<0x7F800000> : vector<1xf32>
    %14 = vector.multi_reduction <minimumf>, %13, %cst_10 [1, 2] : vector<1x16x128xf32> to vector<1xf32>
    %15 = vector.shape_cast %14 : vector<1xf32> to vector<1x1x1xf32>
    %16 = vector.extract %15[0, 0, 0] : f32 from vector<1x1x1xf32>
    %cst_11 = arith.constant 0.000000e+00 : f32
    %17 = arith.cmpf ogt, %16, %cst_11 : f32
    %18 = arith.extui %17 : i1 to i32
    %19 = vector.broadcast %18 : i32 to vector<1x1xi32>
    %20 = vector.shape_cast %19 : vector<1x1xi32> to vector<1x1xi32>
    %21 = vector.broadcast %20 : vector<1x1xi32> to vector<8x128xi32>
    %c0_12 = arith.constant 0 : index
    %c0_13 = arith.constant 0 : index
    %22 = vector.load %arg6[%c0_12, %c0_13] : memref<8x128xi32, #tpu.memory_space<vmem>>, vector<8x128xi32>
    tpu.vector_store %arg6[%c0_12, %c0_13], %21 {strides = array<i32>} : memref<8x128xi32, #tpu.memory_space<vmem>>, vector<8x128xi32>,
    return
  }
  func.func @transform_0(%arg0: i32, %arg1: i32) -> (i32, i32) {
    %c0_i32 = arith.constant 0 : i32
    %c0_i32_0 = arith.constant 0 : i32
    return %arg0, %c0_i32 : i32, i32
  }
  func.func @transform_1(%arg0: i32, %arg1: i32) -> (i32, i32) {
    %c0_i32 = arith.constant 0 : i32
    %c0_i32_0 = arith.constant 0 : i32
    return %c0_i32, %arg1 : i32, i32
  }
  func.func @transform_2(%arg0: i32, %arg1: i32) -> (i32, i32) {
    %c0_i32 = arith.constant 0 : i32
    %c0_i32_0 = arith.constant 0 : i32
    return %c0_i32, %arg1 : i32, i32
  }
  func.func @transform_3(%arg0: i32, %arg1: i32) -> (i32, i32) {
    %c0_i32 = arith.constant 0 : i32
    return %arg0, %arg1 : i32, i32
  }
  func.func @transform_4(%arg0: i32, %arg1: i32) -> (i32, i32) {
    %c0_i32 = arith.constant 0 : i32
    return %arg0, %arg1 : i32, i32
  }
}

</mosaic_0001>

<llo_original>
// kernel: _linear_regressor_forward.1
$region0: #{_linear_regressor_forward.1}
  #allocation0 [shape = 'u32[]', space=smem, size = 0x4, offset = 0x4, fixed_abs, tag = 'smem constant byte address 0x4 - core index']
  #allocation1 [shape = 'u32[144,128]{1,0:T(1,128)}', space=vmem, size = 0x12000, scoped, tag = 'internal scratch']
  %s0 = inlined_call_operand.vmem [shape: f32[16,128], index: 0, kind: input, shape index: {}]
  %s1 = inlined_call_operand.hbm [shape: bf16[128,128], index: 1, kind: input, shape index: {}]
  %s2 = inlined_call_operand.vmem [shape: f32[1,128], index: 2, kind: input, shape index: {}]
  %s3 = inlined_call_operand.vmem [shape: f32[16,128], index: 3, kind: output, shape index: {0}]
  %s4 = inlined_call_operand.vmem [shape: s32[8,128], index: 4, kind: output, shape index: {1}]
  %5 = xla_tuple %s3, %s4
  %s6 = sld [smem:[#allocation0]]
  $region34: #{_linear_regressor_forward.1} parent=0
    _
  %s8 = ssub.s32 1, %s6
  %s9 = scalar_select 0, %s8, %s6
  $region1: #{_linear_regressor_forward.1} parent=0
    #allocation2 [shape = 'u8[32768]{0}', space=vmem, size = 0x8000, scoped, tag = 'input window, operand 1, single buffered']
    #allocation3 [shape = 's32[1]{0}', space=sflag, size = 0x4, scoped, tag = 'scoped memory for _linear_regressor_forward.1']
    %10 = vsyncpa [#allocation3], 0
    // Predicated region
    $region2: #{_linear_regressor_forward.1} parent=1 // pred_check
      _
    $region3: #{_linear_regressor_forward.1} parent=1 // pred_check_branch
      %12 = sbr.rel (0) target = $region5
    $region4: #{_linear_regressor_forward.1} parent=1 // pred_region
      _
    $region5: #{_linear_regressor_forward.1} parent=1 // pred_fallthru
      _
    // Predicated region
    $region6: #{_linear_regressor_forward.1} parent=1 // pred_check
      _
    $region7: #{_linear_regressor_forward.1} parent=1 // pred_check_branch
      %14 = sbr.rel (0) target = $region9
    $region8: #{_linear_regressor_forward.1} parent=1 // pred_region
      %s16 = ssub.s32 1024, 1024
      %17 = vsyncadd [#allocation3], %s16
      %s18 = sshll.u32 [#allocation2], 4
      %s19 = int_to_ptr.vmem [resolvable:$true] %s18
      %24 = dma.hbm_to_vmem [thread:$0]  %s1, 1024, %s19, [#allocation3], 64, 64, 4
    $region9: #{_linear_regressor_forward.1} parent=1 // pred_fallthru
      _
    // Predicated region
    $region10: #{_linear_regressor_forward.1} parent=1 // pred_check
      _
    $region11: #{_linear_regressor_forward.1} parent=1 // pred_check_branch
      %26 = sbr.rel (0) target = $region13
    $region12: #{_linear_regressor_forward.1} parent=1 // pred_region
      _
    $region13: #{_linear_regressor_forward.1} parent=1 // pred_fallthru
      _
    // Predicated region
    $region14: #{_linear_regressor_forward.1} parent=1 // pred_check
      _
    $region15: #{_linear_regressor_forward.1} parent=1 // pred_check_branch
      %28 = sbr.rel (0) target = $region17
    $region16: #{_linear_regressor_forward.1} parent=1 // pred_region
      %29 = dma.done [#allocation3], 1024
    $region17: #{_linear_regressor_forward.1} parent=1 // pred_fallthru
      _
    %v31 = vld [vmem:[%s0] sm:$0xff]
    %v32 = vld [vmem:[%s0 + $0x8] sm:$0xff]
    %v33 = vpack.c.bf16 %v32, %v31
    %v34 = vld [vmem:[#allocation2] sm:$0xf]
    %v35 = vld [vmem:[#allocation2 + $0x4] sm:$0xf]
    %v36 = vld [vmem:[#allocation2 + $0x8] sm:$0xf]
    %v37 = vld [vmem:[#allocation2 + $0xc] sm:$0xf]
    %v38 = vld [vmem:[#allocation2 + $0x10] sm:$0xf]
    %v39 = vld [vmem:[#allocation2 + $0x14] sm:$0xf]
    %v40 = vld [vmem:[#allocation2 + $0x18] sm:$0xf]
    %v41 = vld [vmem:[#allocation2 + $0x1c] sm:$0xf]
    %v42 = vld [vmem:[#allocation2 + $0x20] sm:$0xf]
    %v43 = vld [vmem:[#allocation2 + $0x24] sm:$0xf]
    %v44 = vld [vmem:[#allocation2 + $0x28] sm:$0xf]
    %v45 = vld [vmem:[#allocation2 + $0x2c] sm:$0xf]
    %v46 = vld [vmem:[#allocation2 + $0x30] sm:$0xf]
    %v47 = vld [vmem:[#allocation2 + $0x34] sm:$0xf]
    %v48 = vld [vmem:[#allocation2 + $0x38] sm:$0xf]
    %v49 = vld [vmem:[#allocation2 + $0x3c] sm:$0xf]
    %v50 = vld [vmem:[%s2] sm:$0x1]
    %v52 = vlaneseq
    %v53 = vshrl.u32 %v52, 7
    %v54 = vsub.s32 0, %v53
    %v55 = vrot.slane %v50, %v54
    %v73 = vunpack.c.l.b16 %v34
    %v74 = vunpack.c.l.b16 %v35
    %v75 = vunpack.c.l.b16 %v36
    %v76 = vunpack.c.l.b16 %v37
    %v77 = vunpack.c.l.b16 %v38
    %v78 = vunpack.c.l.b16 %v39
    %v79 = vunpack.c.l.b16 %v40
    %v80 = vunpack.c.l.b16 %v41
    %v81 = vunpack.c.l.b16 %v42
    %v82 = vunpack.c.l.b16 %v43
    %v83 = vunpack.c.l.b16 %v44
    %v84 = vunpack.c.l.b16 %v45
    %v85 = vunpack.c.l.b16 %v46
    %v86 = vunpack.c.l.b16 %v47
    %v87 = vunpack.c.l.b16 %v48
    %v88 = vunpack.c.l.b16 %v49
    %v89 = vpack.c.b16 %v74, %v73
    %v90 = vpack.c.b16 %v76, %v75
    %v91 = vpack.c.b16 %v78, %v77
    %v92 = vpack.c.b16 %v80, %v79
    %v93 = vpack.c.b16 %v82, %v81
    %v94 = vpack.c.b16 %v84, %v83
    %v95 = vpack.c.b16 %v86, %v85
    %v96 = vpack.c.b16 %v88, %v87
    %105 = vmatprep.subr.bf16.mxu0 0
    %106 = vmatpush1.bf16.msra.mxu0 %v96
    %107 = vmatprep.subr.bf16.mxu0 0
    %108 = vmatpush1.bf16.msra.mxu0 %v95
    %109 = vmatprep.subr.bf16.mxu0 0
    %110 = vmatpush1.bf16.msra.mxu0 %v94
    %111 = vmatprep.subr.bf16.mxu0 0
    %112 = vmatpush1.bf16.msra.mxu0 %v93
    %113 = vmatprep.subr.bf16.mxu0 0
    %114 = vmatpush1.bf16.msra.mxu0 %v92
    %115 = vmatprep.subr.bf16.mxu0 0
    %116 = vmatpush1.bf16.msra.mxu0 %v91
    %117 = vmatprep.subr.bf16.mxu0 0
    %118 = vmatpush1.bf16.msra.mxu0 %v90
    %119 = vmatprep.subr.bf16.mxu0 0
    %120 = vmatpush1.bf16.msra.mxu0 %v89
    %121 = vmatprep.subr.bf16.mxu0 0
    %122 = vmatpush2.bf16.msra.mxu0 0
    %123 = vmatprep.subr.bf16.mxu0 0
    %124 = vmatpush2.bf16.msra.mxu0 0
    %125 = vmatprep.subr.bf16.mxu0 0
    %126 = vmatpush2.bf16.msra.mxu0 0
    %127 = vmatprep.subr.bf16.mxu0 0
    %128 = vmatpush2.bf16.msra.mxu0 0
    %129 = vmatprep.subr.bf16.mxu0 0
    %130 = vmatpush2.bf16.msra.mxu0 0
    %131 = vmatprep.subr.bf16.mxu0 0
    %132 = vmatpush2.bf16.msra.mxu0 0
    %133 = vmatprep.subr.bf16.mxu0 0
    %134 = vmatpush2.bf16.msra.mxu0 0
    %135 = vmatprep.subr.bf16.mxu0 0
    %136 = vmatpush2.bf16.msra.mxu0 0
    %137 = vmatprep.mubr.bf16.mxu0 0
    %138 = vmatmul.mubr.bf16.gmra.mxu0 %v33
    %v139 = vpop.f32.mrf.mxu0
    %v140 = vadd.f32 %v55, %v139
    %v141 = vpop.f32.mrf.mxu0
    %v142 = vpop.f32.mrf.mxu0
    %v143 = vadd.f32 %v55, %v142
    %v144 = vpop.f32.mrf.mxu0
    %145 = vdwg.mxu0
    %146 = vst [vmem:[%s3] sm:$0xff] %v140
    %147 = vst [vmem:[%s3 + $0x8] sm:$0xff] %v143
    %vm148 = vweird.f32 %v140
    %vm149 = vweird.f32 %v143
    %vm150 = vmxor %vm148, 1
    %vm151 = vmxor %vm149, 1
    %v152 = vsel %vm150, 1.0, 0.0
    %v153 = vsel %vm151, 1.0, 0.0
    %v154 = vmin.f32 %v152, %v153
    %155 = vmin.xlane.f32.xlu0 %v154
    %v156 = vpop.xlane.xlu0 %155
    %v157 = vrot.slane %v156, 4
    %v158 = vmin.f32 %v156, %v157
    %v159 = vrot.slane %v158, 2
    %v160 = vmin.f32 %v158, %v159
    %v161 = vrot.slane %v160, 1
    %v162 = vmin.f32 %v160, %v161
    %s163 = vtos %v162
    %p164 = scmp.gt.f32.partialorder %s163, 0.0
    %s165 = scalar_select %p164, 1, 0
    %v166 = vstv %s165
    %167 = vst [vmem:[%s4] sm:$0xff] %v166
    // Predicated region
    $region18: #{_linear_regressor_forward.1} parent=1 // pred_check
      _
    $region19: #{_linear_regressor_forward.1} parent=1 // pred_check_branch
      %169 = sbr.rel (0) target = $region21
    $region20: #{_linear_regressor_forward.1} parent=1 // pred_region
      _
    $region21: #{_linear_regressor_forward.1} parent=1 // pred_fallthru
      _
    // Predicated region
    $region22: #{_linear_regressor_forward.1} parent=1 // pred_check
      _
    $region23: #{_linear_regressor_forward.1} parent=1 // pred_check_branch
      %171 = sbr.rel (0) target = $region25
    $region24: #{_linear_regressor_forward.1} parent=1 // pred_region
      _
    $region25: #{_linear_regressor_forward.1} parent=1 // pred_fallthru
      _
    // Predicated region
    $region26: #{_linear_regressor_forward.1} parent=1 // pred_check
      _
    $region27: #{_linear_regressor_forward.1} parent=1 // pred_check_branch
      %173 = sbr.rel (0) target = $region29
    $region28: #{_linear_regressor_forward.1} parent=1 // pred_region
      _
    $region29: #{_linear_regressor_forward.1} parent=1 // pred_fallthru
      _
    // Predicated region
    $region30: #{_linear_regressor_forward.1} parent=1 // pred_check
      _
    $region31: #{_linear_regressor_forward.1} parent=1 // pred_check_branch
      %175 = sbr.rel (0) target = $region33
    $region32: #{_linear_regressor_forward.1} parent=1 // pred_region
      _
    $region33: #{_linear_regressor_forward.1} parent=1 // pred_fallthru
      _
    %176 = vsyncpa [#allocation3], 1

</llo_original>
